<compile_context>
chip_gen: v6e
topology: v6e:2x2x1
jax: 0.10.0
libtpu: 0.0.40
codegen_flags: <defaults>
</compile_context>

<pallas_src>
import jax
import jax.numpy as jnp
from jax.experimental import pallas as pl
from jax.experimental.pallas import tpu as pltpu


def _fuser_kernel_x2_full(x1_ref, x2_ref, w1_ref, w2_ref, b_ref, o_ref):
    # x1_ref: (1, TS, D1), x2_ref: (1, TS, D2), w1_ref: (D1, O), w2_ref: (D2, O)
    # b_ref: (1, O), o_ref: (1, TS, O)
    acc = jnp.dot(x1_ref[0], w1_ref[...], preferred_element_type=jnp.float32)
    acc += jnp.dot(x2_ref[0], w2_ref[...], preferred_element_type=jnp.float32)
    acc += b_ref[...]                      # (1, O) broadcast over TS rows
    o_ref[0] = acc.astype(o_ref.dtype)


def _fuser_kernel_x2_bcast(x1_ref, x2_ref, w1_ref, w2_ref, b_ref, o_ref):
    # x1_ref: (1, TS, D1), x2_ref: (1, 1, D2)  -- one x2 row per batch, no S-broadcast
    acc = jnp.dot(x1_ref[0], w1_ref[...], preferred_element_type=jnp.float32)
    v2 = jnp.dot(x2_ref[0], w2_ref[...], preferred_element_type=jnp.float32)  # (1, O)
    acc += v2 + b_ref[...]                 # broadcast (1, O) over TS rows
    o_ref[0] = acc.astype(o_ref.dtype)


def _choose_ts(S, max_ts=512):
    # Row-tile size: full S when small (always legal block), else a multiple of
    # 8 (sublane-aligned); sized well under v7x's 64 MiB VMEM for typical dims.
    if S <= max_ts:
        return S
    return max_ts - (max_ts % 8)


def fuser_forward(x1, x2, weight, bias):
    """Replicates Fuser.forward.

    x1:     (B, S, D1)
    x2:     (B, D2) or (B, S, D2)
    weight: (O, D1 + D2)   -- PyTorch nn.Linear layout
    bias:   (O,)
    returns (B, S, O)
    """
    B, S, D1 = x1.shape
    O, Din = weight.shape
    D2 = Din - D1

    # One transpose of the fused weight, then cheap splits (weights are tiny
    # relative to activations); both stay VMEM-resident inside the kernel.
    wt = weight.T                    # (D1 + D2, O)
    w1 = wt[:D1]                     # (D1, O)
    w2 = wt[D1:]                     # (D2, O)
    b = bias.reshape(1, O)

    TS = _choose_ts(S)
    grid = (B, pl.cdiv(S, TS))

    x1_spec = pl.BlockSpec((1, TS, D1), lambda b_, s_: (b_, s_, 0))
    w1_spec = pl.BlockSpec((D1, O), lambda b_, s_: (0, 0))
    w2_spec = pl.BlockSpec((D2, O), lambda b_, s_: (0, 0))
    b_spec = pl.BlockSpec((1, O), lambda b_, s_: (0, 0))
    out_spec = pl.BlockSpec((1, TS, O), lambda b_, s_: (b_, s_, 0))

    if x2.ndim < 3:
        # Keep x2 as one row per batch -- never materialize the S-fold repeat.
        x2_in = x2.reshape(B, 1, D2)
        x2_spec = pl.BlockSpec((1, 1, D2), lambda b_, s_: (b_, 0, 0))
        kernel = _fuser_kernel_x2_bcast
    else:
        x2_in = x2
        x2_spec = pl.BlockSpec((1, TS, D2), lambda b_, s_: (b_, s_, 0))
        kernel = _fuser_kernel_x2_full

    out = pl.pallas_call(
        kernel,
        out_shape=jax.ShapeDtypeStruct((B, S, O), x1.dtype),
        grid_spec=pltpu.PrefetchScalarGridSpec(
            num_scalar_prefetch=0,
            grid=grid,
            in_specs=[x1_spec, x2_spec, w1_spec, w2_spec, b_spec],
            out_specs=out_spec,
        ),
        compiler_params=pltpu.CompilerParams(
            dimension_semantics=("parallel", "parallel"),
        ),
    )(x1, x2_in, w1, w2, b)

    return out


def _reference(x1, x2, weight, bias):
    B, S, D1 = x1.shape
    if x2.ndim < 3:
        x2 = jnp.broadcast_to(x2[:, None, :], (B, S, x2.shape[-1]))
    x = jnp.concatenate([x1, x2], axis=-1)
    return x @ weight.T + bias


if __name__ == "__main__":
    key = jax.random.PRNGKey(0)
    k1, k2a, k2b, kw, kb = jax.random.split(key, 5)

    B, S = 2, 8
    in_dim1, in_dim2, out_dim = 16, 16, 32

    x1 = jax.random.normal(k1, (B, S, in_dim1), dtype=jnp.float32)
    x2_2d = jax.random.normal(k2a, (B, in_dim2), dtype=jnp.float32)      # dim() < 3 path
    x2_3d = jax.random.normal(k2b, (B, S, in_dim2), dtype=jnp.float32)   # dim() == 3 path

    # Deterministic parameter init (uniform like PyTorch Linear default).
    bound = 1.0 / jnp.sqrt(in_dim1 + in_dim2)
    weight = jax.random.uniform(
        kw, (out_dim, in_dim1 + in_dim2), minval=-bound, maxval=bound,
        dtype=jnp.float32)
    bias = jax.random.uniform(
        kb, (out_dim,), minval=-bound, maxval=bound, dtype=jnp.float32)

    ok = True
    for x2 in (x2_2d, x2_3d):
        y = fuser_forward(x1, x2, weight, bias)
        jax.block_until_ready(y)
        y_ref = _reference(x1, x2, weight, bias)
        ok &= bool(jnp.allclose(y, y_ref, atol=1e-4, rtol=1e-4))

    if ok:
        print("KERNEL_OK")
    else:
        print("KERNEL_MISMATCH")
</pallas_src>

<mosaic_0001>
module attributes {stable_mosaic.version = 11 : i64} {
  func.func @_fuser_kernel_x2_bcast(%arg0: i32, %arg1: i32, %arg2: memref<1x8x16xf32, #tpu.memory_space<vmem>>, %arg3: memref<1x1x16xf32, #tpu.memory_space<vmem>>, %arg4: memref<16x32xf32, #tpu.memory_space<vmem>>, %arg5: memref<16x32xf32, #tpu.memory_space<vmem>>, %arg6: memref<1x32xf32, #tpu.memory_space<vmem>>, %arg7: memref<1x8x32xf32, #tpu.memory_space<vmem>>) attributes {dimension_semantics = [#tpu.dimension_semantics<parallel>, #tpu.dimension_semantics<parallel>], iteration_bounds = array<i64: 2, 1>, scalar_prefetch = 0 : i64, scratch_operands = 0 : i64, tpu.core_type = #tpu.core_type<tc>, window_params = [{transform_indices = @transform_0, window_bounds = array<i64: 1, 8, 16>}, {transform_indices = @transform_1, window_bounds = array<i64: 1, 1, 16>}, {pipeline_mode = #tpu.pipeline_mode<synchronous>, transform_indices = @transform_2, window_bounds = array<i64: 16, 32>}, {pipeline_mode = #tpu.pipeline_mode<synchronous>, transform_indices = @transform_3, window_bounds = array<i64: 16, 32>}, {pipeline_mode = #tpu.pipeline_mode<synchronous>, transform_indices = @transform_4, window_bounds = array<i64: 1, 32>}, {transform_indices = @transform_5, window_bounds = array<i64: 1, 8, 32>}]} {
    %c0 = arith.constant 0 : index
    %c0_0 = arith.constant 0 : index
    %c0_1 = arith.constant 0 : index
    %0 = vector.load %arg2[%c0, %c0_0, %c0_1] : memref<1x8x16xf32, #tpu.memory_space<vmem>>, vector<1x8x16xf32>
    %1 = vector.shape_cast %0 : vector<1x8x16xf32> to vector<8x16xf32>
    %c0_2 = arith.constant 0 : index
    %c0_3 = arith.constant 0 : index
    %2 = vector.load %arg4[%c0_2, %c0_3] : memref<16x32xf32, #tpu.memory_space<vmem>>, vector<16x32xf32>
    %cst = arith.constant dense<0.000000e+00> : vector<8x32xf32>
    %3 = tpu.matmul %1, %2, %cst {dimension_numbers = #tpu.dot_dimension_numbers<[1], [0], [0], [1], [0, 0, 1, 1], [], []>} : vector<8x16xf32>, vector<16x32xf32>, vector<8x32xf32> -> vector<8x32xf32>
    %c0_4 = arith.constant 0 : index
    %c0_5 = arith.constant 0 : index
    %c0_6 = arith.constant 0 : index
    %4 = vector.load %arg3[%c0_4, %c0_5, %c0_6] : memref<1x1x16xf32, #tpu.memory_space<vmem>>, vector<1x1x16xf32>
    %5 = vector.shape_cast %4 : vector<1x1x16xf32> to vector<1x16xf32>
    %c0_7 = arith.constant 0 : index
    %c0_8 = arith.constant 0 : index
    %6 = vector.load %arg5[%c0_7, %c0_8] : memref<16x32xf32, #tpu.memory_space<vmem>>, vector<16x32xf32>
    %cst_9 = arith.constant dense<0.000000e+00> : vector<1x32xf32>
    %7 = tpu.matmul %5, %6, %cst_9 {dimension_numbers = #tpu.dot_dimension_numbers<[1], [0], [0], [1], [0, 0, 1, 1], [], []>} : vector<1x16xf32>, vector<16x32xf32>, vector<1x32xf32> -> vector<1x32xf32>
    %c0_10 = arith.constant 0 : index
    %c0_11 = arith.constant 0 : index
    %8 = vector.load %arg6[%c0_10, %c0_11] : memref<1x32xf32, #tpu.memory_space<vmem>>, vector<1x32xf32>
    %9 = arith.addf %7, %8 : vector<1x32xf32>
    %10 = vector.broadcast %9 : vector<1x32xf32> to vector<8x32xf32>
    %11 = arith.addf %3, %10 : vector<8x32xf32>
    %c0_12 = arith.constant 0 : index
    %c0_13 = arith.constant 0 : index
    %c0_14 = arith.constant 0 : index
    %12 = vector.load %arg7[%c0_12, %c0_13, %c0_14] : memref<1x8x32xf32, #tpu.memory_space<vmem>>, vector<1x8x32xf32>
    %13 = vector.shape_cast %12 : vector<1x8x32xf32> to vector<8x32xf32>
    %14 = vector.shape_cast %11 : vector<8x32xf32> to vector<1x8x32xf32>
    tpu.vector_store %arg7[%c0_12, %c0_13, %c0_14], %14 {strides = array<i32>} : memref<1x8x32xf32, #tpu.memory_space<vmem>>, vector<1x8x32xf32>,
    return
  }
  func.func @transform_0(%arg0: i32, %arg1: i32) -> (i32, i32, i32) {
    %c0_i32 = arith.constant 0 : i32
    %c0_i32_0 = arith.constant 0 : i32
    return %arg0, %arg1, %c0_i32 : i32, i32, i32
  }
  func.func @transform_1(%arg0: i32, %arg1: i32) -> (i32, i32, i32) {
    %c0_i32 = arith.constant 0 : i32
    %c0_i32_0 = arith.constant 0 : i32
    %c0_i32_1 = arith.constant 0 : i32
    return %arg0, %c0_i32, %c0_i32_0 : i32, i32, i32
  }
  func.func @transform_2(%arg0: i32, %arg1: i32) -> (i32, i32) {
    %c0_i32 = arith.constant 0 : i32
    %c0_i32_0 = arith.constant 0 : i32
    %c0_i32_1 = arith.constant 0 : i32
    return %c0_i32, %c0_i32_0 : i32, i32
  }
  func.func @transform_3(%arg0: i32, %arg1: i32) -> (i32, i32) {
    %c0_i32 = arith.constant 0 : i32
    %c0_i32_0 = arith.constant 0 : i32
    %c0_i32_1 = arith.constant 0 : i32
    return %c0_i32, %c0_i32_0 : i32, i32
  }
  func.func @transform_4(%arg0: i32, %arg1: i32) -> (i32, i32) {
    %c0_i32 = arith.constant 0 : i32
    %c0_i32_0 = arith.constant 0 : i32
    %c0_i32_1 = arith.constant 0 : i32
    return %c0_i32, %c0_i32_0 : i32, i32
  }
  func.func @transform_5(%arg0: i32, %arg1: i32) -> (i32, i32, i32) {
    %c0_i32 = arith.constant 0 : i32
    %c0_i32_0 = arith.constant 0 : i32
    return %arg0, %arg1, %c0_i32 : i32, i32, i32
  }
}

</mosaic_0001>

<llo_original>
// kernel: tpu_custom_call.1
$region0: #{tpu_custom_call.1}
  #allocation0 [shape = 'u32[]', space=smem, size = 0x4, offset = 0x4, fixed_abs, tag = 'smem constant byte address 0x4 - core index']
  #allocation1 [shape = 'u32[144,128]{1,0:T(1,128)}', space=vmem, size = 0x12000, scoped, tag = 'internal scratch']
  %s0 = inlined_call_operand.hbm [shape: f32[2,8,16], index: 0, kind: input, shape index: {}]
  %s1 = inlined_call_operand.hbm [shape: f32[2,1,16], index: 1, kind: input, shape index: {}]
  %s2 = inlined_call_operand.hbm [shape: f32[16,32], index: 2, kind: input, shape index: {}]
  %s3 = inlined_call_operand.hbm [shape: f32[16,32], index: 3, kind: input, shape index: {}]
  %s4 = inlined_call_operand.vmem [shape: f32[1,32], index: 4, kind: input, shape index: {}]
  %s5 = inlined_call_operand.hbm [shape: f32[2,8,32], index: 5, kind: output, shape index: {}]
  %s6 = sld [smem:[#allocation0]]
  $region69: #{tpu_custom_call.1} parent=0
    _
  %s8 = ssub.s32 1, %s6
  %s9 = scalar_select 0, %s8, %s6
  $region1: #{tpu_custom_call.1} parent=0
    #allocation2 [shape = 'u8[8192]{0}', space=vmem, size = 0x2000, scoped, tag = 'input window, operand 0']
    #allocation3 [shape = 's32[2]{0}', space=sflag, size = 0x8, scoped, tag = 'scoped memory for tpu_custom_call.1']
    #allocation4 [shape = 's32[2]{0}', space=sflag, size = 0x8, scoped, tag = 'scoped memory for tpu_custom_call.1']
    #allocation5 [shape = 'u8[1024]{0}', space=vmem, size = 0x400, scoped, tag = 'input window, operand 1']
    #allocation6 [shape = 's32[2]{0}', space=sflag, size = 0x8, scoped, tag = 'scoped memory for tpu_custom_call.1']
    #allocation7 [shape = 'u8[8192]{0}', space=vmem, size = 0x2000, scoped, tag = 'input window, operand 2, single buffered']
    #allocation8 [shape = 'u8[8192]{0}', space=vmem, size = 0x2000, scoped, tag = 'input window, operand 3, single buffered']
    #allocation9 [shape = 's32[1]{0}', space=sflag, size = 0x4, scoped, tag = 'scoped memory for tpu_custom_call.1']
    #allocation10 [shape = 'u8[8192]{0}', space=vmem, size = 0x2000, scoped, tag = 'output window, operand 0']
    %10 = vsyncpa [#allocation3], 0
    %s11 = scalar_lea.sflag [#allocation3], 1
    %12 = vsyncpa %s11, 0
    %13 = vsyncpa [#allocation6], 0
    %s14 = scalar_lea.sflag [#allocation6], 1
    %15 = vsyncpa %s14, 0
    %16 = vsyncpa [#allocation9], 0
    %17 = vsyncpa [#allocation4], 0
    %s18 = scalar_lea.sflag [#allocation4], 1
    %19 = vsyncpa %s18, 0
    loop: start=0, step=1, limit=4
    $region2: #{tpu_custom_call.1} parent=1 // loop_pre_header
      _
    $region3: #{tpu_custom_call.1} parent=1 // loop_header
      %s21 = sphi 0, %s25
      %p22 = scmp.ge.s32.totalorder %s21, 4
      %s28 = sphi 0, %s40
      %s29 = sphi 0, %s36
      %s30 = sphi 0, %s28
      %s31 = sphi 0, %s29
      %s32 = sphi 0, %s30
      %s33 = sphi 0, %s31
      %s45 = sphi 0, %s47
      %s48 = sphi 0, %s45
      %s49 = sphi 0, %s48
      %s65 = sphi 0, %s49
      %s71 = sphi 0, %s73
      %s74 = sphi 0, %s71
      %s75 = sphi 0, %s74
      %s91 = sphi 0, %s75
      %s95 = sphi 0, %s95
      %s97 = sphi 0, %s95
      %s98 = sphi 0, %s97
      %s112 = sphi 0, %s98
      %s116 = sphi 0, %s116
      %s118 = sphi 0, %s116
      %s119 = sphi 0, %s118
      %s133 = sphi 0, %s119
      %s137 = sphi 0, %s137
      %s139 = sphi 0, %s137
      %s140 = sphi 0, %s139
      %s154 = sphi 0, %s140
      %s162 = sphi 0, %s164
      %s165 = sphi 0, %s162
      %s166 = sphi 0, %s165
      %s182 = sphi 0, %s166
    $region4: #{tpu_custom_call.1} parent=1 // loop_header_branch
      %24 = sbr.rel (%p22) target = $region8
    $region5: #{tpu_custom_call.1} parent=1 // loop_body
      %s26 = ssub.s32 %s21, 1
      %s27 = ssub.s32 %s21, 2
      %s34 = sadd.s32 1, %s29
      %p35 = scmp.ge.s32.totalorder %s34, 1
      %s36 = scalar_select %p35, 0, %s34
      %s37 = sadd.s32 1, %s28
      %s38 = scalar_select %p35, %s37, %s28
      %p39 = scmp.ge.s32.totalorder %s38, 2
      %s40 = scalar_select %p39, 0, %s38
      %s41 = ssub.s32 %s28, %s40
      %s42 = ssub.s32 %s29, %s36
      %s43 = sor.u32 %s41, %s42
      %p44 = scmp.eq.s32.totalorder %s43, 0
      %s46 = sadd.s32 %s45, 1
      %s47 = scalar_select %p44, %s45, %s46
      %p50 = pneg %p44
      %p51 = scmp.eq.s32.totalorder %s21, 1
      %p52 = por %p50, %p51
      %p53 = scmp.ne.s32.totalorder %s45, %s48
      %p54 = scmp.eq.s32.totalorder %s21, 0
      %p55 = por %p53, %p54
      %p56 = scmp.ne.s32.totalorder %s45, %s48
      %p57 = scmp.eq.s32.totalorder %s26, 1
      %p58 = por %p56, %p57
      %p59 = scmp.ne.s32.totalorder %s48, %s49
      %p60 = scmp.eq.s32.totalorder %s26, 0
      %p61 = por %p59, %p60
      %p62 = scmp.ne.s32.totalorder %s48, %s49
      %p63 = scmp.eq.s32.totalorder %s27, 1
      %p64 = por %p62, %p63
      %p66 = scmp.ne.s32.totalorder %s49, %s65
      %p67 = scmp.eq.s32.totalorder %s27, 0
      %p68 = por %p66, %p67
      %s69 = ssub.s32 %s28, %s40
      %p70 = scmp.eq.s32.totalorder %s69, 0
      %s72 = sadd.s32 %s71, 1
      %s73 = scalar_select %p70, %s71, %s72
      %p76 = pneg %p70
      %p77 = scmp.eq.s32.totalorder %s21, 1
      %p78 = por %p76, %p77
      %p79 = scmp.ne.s32.totalorder %s71, %s74
      %p80 = scmp.eq.s32.totalorder %s21, 0
      %p81 = por %p79, %p80
      %p82 = scmp.ne.s32.totalorder %s71, %s74
      %p83 = scmp.eq.s32.totalorder %s26, 1
      %p84 = por %p82, %p83
      %p85 = scmp.ne.s32.totalorder %s74, %s75
      %p86 = scmp.eq.s32.totalorder %s26, 0
      %p87 = por %p85, %p86
      %p88 = scmp.ne.s32.totalorder %s74, %s75
      %p89 = scmp.eq.s32.totalorder %s27, 1
      %p90 = por %p88, %p89
      %p92 = scmp.ne.s32.totalorder %s75, %s91
      %p93 = scmp.eq.s32.totalorder %s27, 0
      %p94 = por %p92, %p93
      %s96 = sadd.s32 %s95, 1
      %p99 = scmp.eq.s32.totalorder %s21, 1
      %p100 = scmp.ne.s32.totalorder %s95, %s97
      %p101 = scmp.eq.s32.totalorder %s21, 0
      %p102 = por %p100, %p101
      %p103 = scmp.ne.s32.totalorder %s95, %s97
      %p104 = scmp.eq.s32.totalorder %s26, 1
      %p105 = por %p103, %p104
      %p106 = scmp.ne.s32.totalorder %s97, %s98
      %p107 = scmp.eq.s32.totalorder %s26, 0
      %p108 = por %p106, %p107
      %p109 = scmp.ne.s32.totalorder %s97, %s98
      %p110 = scmp.eq.s32.totalorder %s27, 1
      %p111 = por %p109, %p110
      %p113 = scmp.ne.s32.totalorder %s98, %s112
      %p114 = scmp.eq.s32.totalorder %s27, 0
      %p115 = por %p113, %p114
      %s117 = sadd.s32 %s116, 1
      %p120 = scmp.eq.s32.totalorder %s21, 1
      %p121 = scmp.ne.s32.totalorder %s116, %s118
      %p122 = scmp.eq.s32.totalorder %s21, 0
      %p123 = por %p121, %p122
      %p124 = scmp.ne.s32.totalorder %s116, %s118
      %p125 = scmp.eq.s32.totalorder %s26, 1
      %p126 = por %p124, %p125
      %p127 = scmp.ne.s32.totalorder %s118, %s119
      %p128 = scmp.eq.s32.totalorder %s26, 0
      %p129 = por %p127, %p128
      %p130 = scmp.ne.s32.totalorder %s118, %s119
      %p131 = scmp.eq.s32.totalorder %s27, 1
      %p132 = por %p130, %p131
      %p134 = scmp.ne.s32.totalorder %s119, %s133
      %p135 = scmp.eq.s32.totalorder %s27, 0
      %p136 = por %p134, %p135
      %s138 = sadd.s32 %s137, 1
      %p141 = scmp.eq.s32.totalorder %s21, 1
      %p142 = scmp.ne.s32.totalorder %s137, %s139
      %p143 = scmp.eq.s32.totalorder %s21, 0
      %p144 = por %p142, %p143
      %p145 = scmp.ne.s32.totalorder %s137, %s139
      %p146 = scmp.eq.s32.totalorder %s26, 1
      %p147 = por %p145, %p146
      %p148 = scmp.ne.s32.totalorder %s139, %s140
      %p149 = scmp.eq.s32.totalorder %s26, 0
      %p150 = por %p148, %p149
      %p151 = scmp.ne.s32.totalorder %s139, %s140
      %p152 = scmp.eq.s32.totalorder %s27, 1
      %p153 = por %p151, %p152
      %p155 = scmp.ne.s32.totalorder %s140, %s154
      %p156 = scmp.eq.s32.totalorder %s27, 0
      %p157 = por %p155, %p156
      %s158 = ssub.s32 %s28, %s40
      %s159 = ssub.s32 %s29, %s36
      %s160 = sor.u32 %s158, %s159
      %p161 = scmp.eq.s32.totalorder %s160, 0
      %s163 = sadd.s32 %s162, 1
      %s164 = scalar_select %p161, %s162, %s163
      %p167 = pneg %p161
      %p168 = scmp.eq.s32.totalorder %s21, 1
      %p169 = por %p167, %p168
      %p170 = scmp.ne.s32.totalorder %s162, %s165
      %p171 = scmp.eq.s32.totalorder %s21, 0
      %p172 = por %p170, %p171
      %p173 = scmp.ne.s32.totalorder %s162, %s165
      %p174 = scmp.eq.s32.totalorder %s26, 1
      %p175 = por %p173, %p174
      %p176 = scmp.ne.s32.totalorder %s165, %s166
      %p177 = scmp.eq.s32.totalorder %s26, 0
      %p178 = por %p176, %p177
      %p179 = scmp.ne.s32.totalorder %s165, %s166
      %p180 = scmp.eq.s32.totalorder %s27, 1
      %p181 = por %p179, %p180
      %p183 = scmp.ne.s32.totalorder %s166, %s182
      %p184 = scmp.eq.s32.totalorder %s27, 0
      %p185 = por %p183, %p184
      %p186 = scmp.le.s32.totalorder 1, %s21
      %p187 = scmp.lt.s32.totalorder %s21, 3
      %p188 = pnand %p186, %p187
      %p189 = pneg %p188
      // Predicated region
      $region9: #{tpu_custom_call.1} parent=5 // pred_check
        _
      $region10: #{tpu_custom_call.1} parent=5 // pred_check_branch
        %191 = sbr.rel (%p188) target = $region12
      $region11: #{tpu_custom_call.1} parent=5 // pred_region
        %s192 = ssub.s32 %s21, 1
        // Predicated region
        $region13: #{tpu_custom_call.1} parent=11 // pred_check
          %p193 = pneg %p108
        $region14: #{tpu_custom_call.1} parent=11 // pred_check_branch
          %195 = sbr.rel (%p193) target = $region16
        $region15: #{tpu_custom_call.1} parent=11 // pred_region
          %s197 = ssub.s32 256, 256
          %198 = vsyncadd [#allocation6], %s197
          %s199 = sshll.u32 [#allocation7], 4
          %s200 = int_to_ptr.vmem [resolvable:$true] %s199
          %205 = dma.hbm_to_vmem [thread:$0]  %s2, 256, %s200, [#allocation6], 128, 128, 8
        $region16: #{tpu_custom_call.1} parent=11 // pred_fallthru
          _
        // Predicated region
        $region17: #{tpu_custom_call.1} parent=11 // pred_check
          %p206 = pneg %p129
        $region18: #{tpu_custom_call.1} parent=11 // pred_check_branch
          %208 = sbr.rel (%p206) target = $region20
        $region19: #{tpu_custom_call.1} parent=11 // pred_region
          %s210 = ssub.s32 256, 256
          %211 = vsyncadd [#allocation9], %s210
          %s212 = sshll.u32 [#allocation8], 4
          %s213 = int_to_ptr.vmem [resolvable:$true] %s212
          %218 = dma.hbm_to_vmem [thread:$0]  %s3, 256, %s213, [#allocation9], 128, 128, 8
        $region20: #{tpu_custom_call.1} parent=11 // pred_fallthru
          _
        // Predicated region
        $region21: #{tpu_custom_call.1} parent=11 // pred_check
          %p219 = pneg %p150
        $region22: #{tpu_custom_call.1} parent=11 // pred_check_branch
          %221 = sbr.rel (%p219) target = $region24
        $region23: #{tpu_custom_call.1} parent=11 // pred_region
          _
        $region24: #{tpu_custom_call.1} parent=11 // pred_fallthru
          _
      $region12: #{tpu_custom_call.1} parent=5 // pred_fallthru
        _
      %p222 = scmp.lt.s32.totalorder %s21, 2
      // Predicated region
      $region25: #{tpu_custom_call.1} parent=5 // pred_check
        %p223 = pneg %p222
      $region26: #{tpu_custom_call.1} parent=5 // pred_check_branch
        %225 = sbr.rel (%p223) target = $region28
      $region27: #{tpu_custom_call.1} parent=5 // pred_region
        // Predicated region
        $region29: #{tpu_custom_call.1} parent=27 // pred_check
          %p226 = pneg %p55
        $region30: #{tpu_custom_call.1} parent=27 // pred_check_branch
          %228 = sbr.rel (%p226) target = $region32
        $region31: #{tpu_custom_call.1} parent=27 // pred_region
          %s229 = sand.u32 %s45, 1
          %s230 = scalar_lea.sflag [#allocation3], %s229
          %s231 = sand.u32 %s45, 1
          %s232 = smul.addr %s231, 8
          %s233 = scalar_lea.vmem [#allocation2], %s232
          %s235 = ssub.s32 128, 128
          %236 = vsyncadd %s230, %s235
          %s237 = sadd.s32 %s29, %s28
          %s238 = smul.addr %s237, 128
          %s239 = scalar_lea.hbm %s0, %s238
          %s241 = sshll.u32 %s233, 4
          %s242 = int_to_ptr.vmem [resolvable:$true] %s241
          %244 = dma.hbm_to_vmem [thread:$0]  %s239, 128, %s242, %s230
        $region32: #{tpu_custom_call.1} parent=27 // pred_fallthru
          _
        // Predicated region
        $region33: #{tpu_custom_call.1} parent=27 // pred_check
          %p245 = pneg %p81
        $region34: #{tpu_custom_call.1} parent=27 // pred_check_branch
          %247 = sbr.rel (%p245) target = $region36
        $region35: #{tpu_custom_call.1} parent=27 // pred_region
          %s248 = sand.u32 %s21, 1
          %s249 = scalar_lea.sflag [#allocation6], %s248
          %s250 = sand.u32 %s71, 1
          %s251 = scalar_lea.vmem [#allocation5], %s250
          %s253 = ssub.s32 16, 16
          %254 = vsyncadd %s249, %s253
          %s255 = smul.addr %s28, 16
          %s256 = scalar_lea.hbm %s1, %s255
          %s258 = sshll.u32 %s251, 4
          %s259 = int_to_ptr.vmem [resolvable:$true] %s258
          %261 = dma.hbm_to_vmem [thread:$0]  %s256, 16, %s259, %s249
        $region36: #{tpu_custom_call.1} parent=27 // pred_fallthru
          _
      $region28: #{tpu_custom_call.1} parent=5 // pred_fallthru
        _
      %p262 = scmp.le.s32.totalorder 1, %s21
      %p263 = scmp.lt.s32.totalorder %s21, 3
      %p264 = pnand %p262, %p263
      %p265 = pneg %p264
      // Predicated region
      $region37: #{tpu_custom_call.1} parent=5 // pred_check
        _
      $region38: #{tpu_custom_call.1} parent=5 // pred_check_branch
        %267 = sbr.rel (%p264) target = $region40
      $region39: #{tpu_custom_call.1} parent=5 // pred_region
        %s268 = ssub.s32 %s21, 1
        %s269 = sand.u32 %s48, 1
        %s270 = scalar_lea.sflag [#allocation3], %s269
        %s271 = sand.u32 %s48, 1
        %s272 = smul.addr %s271, 8
        %s273 = scalar_lea.vmem [#allocation2], %s272
        // Predicated region
        $region41: #{tpu_custom_call.1} parent=39 // pred_check
          %p274 = pneg %p61
        $region42: #{tpu_custom_call.1} parent=39 // pred_check_branch
          %276 = sbr.rel (%p274) target = $region44
        $region43: #{tpu_custom_call.1} parent=39 // pred_region
          %277 = dma.done %s270, 128
        $region44: #{tpu_custom_call.1} parent=39 // pred_fallthru
          _
        %s278 = sand.u32 %s26, 1
        %s279 = scalar_lea.sflag [#allocation6], %s278
        %s280 = sand.u32 %s74, 1
        %s281 = scalar_lea.vmem [#allocation5], %s280
        // Predicated region
        $region45: #{tpu_custom_call.1} parent=39 // pred_check
          %p282 = pneg %p87
        $region46: #{tpu_custom_call.1} parent=39 // pred_check_branch
          %284 = sbr.rel (%p282) target = $region48
        $region47: #{tpu_custom_call.1} parent=39 // pred_region
          %285 = dma.done %s279, 16
        $region48: #{tpu_custom_call.1} parent=39 // pred_fallthru
          _
        // Predicated region
        $region49: #{tpu_custom_call.1} parent=39 // pred_check
          %p286 = pneg %p108
        $region50: #{tpu_custom_call.1} parent=39 // pred_check_branch
          %288 = sbr.rel (%p286) target = $region52
        $region51: #{tpu_custom_call.1} parent=39 // pred_region
          %289 = dma.done [#allocation6], 256
        $region52: #{tpu_custom_call.1} parent=39 // pred_fallthru
          _
        // Predicated region
        $region53: #{tpu_custom_call.1} parent=39 // pred_check
          %p290 = pneg %p129
        $region54: #{tpu_custom_call.1} parent=39 // pred_check_branch
          %292 = sbr.rel (%p290) target = $region56
        $region55: #{tpu_custom_call.1} parent=39 // pred_region
          %293 = dma.done [#allocation9], 256
        $region56: #{tpu_custom_call.1} parent=39 // pred_fallthru
          _
        %s294 = sand.u32 %s48, 1
        %s295 = scalar_lea.sflag [#allocation3], %s294
        %s296 = sand.u32 %s48, 1
        %s297 = smul.addr %s296, 8
        %s298 = scalar_lea.vmem [#allocation2], %s297
        %p299 = pneg %p61
        %p300 = pneg %p58
        %s301 = sand.u32 %s26, 1
        %s302 = scalar_lea.sflag [#allocation6], %s301
        %s303 = sand.u32 %s74, 1
        %s304 = scalar_lea.vmem [#allocation5], %s303
        %p305 = pneg %p87
        %p306 = pneg %p84
        %p307 = pneg %p108
        %p308 = pneg %p105
        %p309 = pneg %p129
        %p310 = pneg %p126
        %p311 = pneg %p150
        %p312 = pneg %p147
        %p313 = pneg %p178
        %p314 = pneg %p175
        %s315 = sand.u32 %s165, 1
        %s316 = scalar_lea.sflag [#allocation4], %s315
        %s317 = sand.u32 %s165, 1
        %s318 = smul.addr %s317, 8
        %s319 = scalar_lea.vmem [#allocation10], %s318
        %v320 = vld [vmem:[%s273] sm:$0xff]
        %v321 = vld [vmem:[#allocation7] sm:$0xff]
        %v322 = vld [vmem:[#allocation7 + $0x8] sm:$0xff]
        %v323 = vld [vmem:[%s281] sm:$0x1]
        %v324 = vld [vmem:[#allocation8] sm:$0xff]
        %v325 = vld [vmem:[#allocation8 + $0x8] sm:$0xff]
        %v326 = vld [vmem:[%s4] sm:$0x1]
        %vm327 = vcmask 130048
        %v329 = vsel %vm327, %v323, 0
        %331 = vmatprep.subr.mxu0 0.0
        %332 = vmatpush1.msra.mxu0 0.0
        %333 = vmatprep.subr.mxu0 0.0
        %334 = vmatpush1.msra.mxu0 0.0
        %335 = vmatprep.subr.mxu0 0.0
        %336 = vmatpush1.msra.mxu0 0.0
        %337 = vmatprep.subr.mxu0 0.0
        %338 = vmatpush1.msra.mxu0 0.0
        %339 = vmatprep.subr.mxu0 0.0
        %340 = vmatpush1.msra.mxu0 0.0
        %341 = vmatprep.subr.mxu0 0.0
        %342 = vmatpush1.msra.mxu0 0.0
        %343 = vmatprep.subr.mxu0 0.0
        %344 = vmatpush1.msra.mxu0 0.0
        %345 = vmatprep.subr.mxu0 0.0
        %346 = vmatpush1.msra.mxu0 0.0
        %347 = vmatprep.subr.mxu0 0.0
        %348 = vmatpush1.msra.mxu0 0.0
        %349 = vmatprep.subr.mxu0 0.0
        %350 = vmatpush1.msra.mxu0 0.0
        %351 = vmatprep.subr.mxu0 0.0
        %352 = vmatpush1.msra.mxu0 0.0
        %353 = vmatprep.subr.mxu0 0.0
        %354 = vmatpush1.msra.mxu0 0.0
        %355 = vmatprep.subr.mxu0 0.0
        %356 = vmatpush1.msra.mxu0 0.0
        %357 = vmatprep.subr.mxu0 0.0
        %358 = vmatpush1.msra.mxu0 0.0
        %359 = vmatprep.subr.mxu0 0.0
        %360 = vmatpush1.msra.mxu0 %v325
        %361 = vmatprep.subr.mxu0 0.0
        %362 = vmatpush1.msra.mxu0 %v324
        %363 = vmatprep.subr.mxu0 0.0
        %364 = vmatpush2.msra.mxu0 0.0
        %365 = vmatprep.subr.mxu0 0.0
        %366 = vmatpush2.msra.mxu0 0.0
        %367 = vmatprep.subr.mxu0 0.0
        %368 = vmatpush2.msra.mxu0 0.0
        %369 = vmatprep.subr.mxu0 0.0
        %370 = vmatpush2.msra.mxu0 0.0
        %371 = vmatprep.subr.mxu0 0.0
        %372 = vmatpush2.msra.mxu0 0.0
        %373 = vmatprep.subr.mxu0 0.0
        %374 = vmatpush2.msra.mxu0 0.0
        %375 = vmatprep.subr.mxu0 0.0
        %376 = vmatpush2.msra.mxu0 0.0
        %377 = vmatprep.subr.mxu0 0.0
        %378 = vmatpush2.msra.mxu0 0.0
        %379 = vmatprep.subr.mxu0 0.0
        %380 = vmatpush2.msra.mxu0 0.0
        %381 = vmatprep.subr.mxu0 0.0
        %382 = vmatpush2.msra.mxu0 0.0
        %383 = vmatprep.subr.mxu0 0.0
        %384 = vmatpush2.msra.mxu0 0.0
        %385 = vmatprep.subr.mxu0 0.0
        %386 = vmatpush2.msra.mxu0 0.0
        %387 = vmatprep.subr.mxu0 0.0
        %388 = vmatpush2.msra.mxu0 0.0
        %389 = vmatprep.subr.mxu0 0.0
        %390 = vmatpush2.msra.mxu0 0.0
        %391 = vmatprep.subr.mxu0 0.0
        %392 = vmatpush2.msra.mxu0 0.0
        %393 = vmatprep.subr.mxu0 0.0
        %394 = vmatpush2.msra.mxu0 0.0
        %395 = vmatprep.mubr.f32.mxu0 0.0
        %396 = vmatmul.mubr.f32.gmra.mxu0 %v329
        %v397 = vpop.f32.mrf.mxu0
        %v398 = vadd.f32 %v326, %v397
        %v399 = vpop.f32.mrf.mxu0
        %400 = vdwg.mxu0
        %v401 = vlaneseq
        %v402 = vshrl.u32 %v401, 7
        %v403 = vsub.s32 0, %v402
        %v404 = vrot.slane %v398, %v403
        %v406 = vsel %vm327, %v320, 0
        %408 = vmatprep.subr.mxu0 0.0
        %409 = vmatpush1.msra.mxu0 0.0
        %410 = vmatprep.subr.mxu0 0.0
        %411 = vmatpush1.msra.mxu0 0.0
        %412 = vmatprep.subr.mxu0 0.0
        %413 = vmatpush1.msra.mxu0 0.0
        %414 = vmatprep.subr.mxu0 0.0
        %415 = vmatpush1.msra.mxu0 0.0
        %416 = vmatprep.subr.mxu0 0.0
        %417 = vmatpush1.msra.mxu0 0.0
        %418 = vmatprep.subr.mxu0 0.0
        %419 = vmatpush1.msra.mxu0 0.0
        %420 = vmatprep.subr.mxu0 0.0
        %421 = vmatpush1.msra.mxu0 0.0
        %422 = vmatprep.subr.mxu0 0.0
        %423 = vmatpush1.msra.mxu0 0.0
        %424 = vmatprep.subr.mxu0 0.0
        %425 = vmatpush1.msra.mxu0 0.0
        %426 = vmatprep.subr.mxu0 0.0
        %427 = vmatpush1.msra.mxu0 0.0
        %428 = vmatprep.subr.mxu0 0.0
        %429 = vmatpush1.msra.mxu0 0.0
        %430 = vmatprep.subr.mxu0 0.0
        %431 = vmatpush1.msra.mxu0 0.0
        %432 = vmatprep.subr.mxu0 0.0
        %433 = vmatpush1.msra.mxu0 0.0
        %434 = vmatprep.subr.mxu0 0.0
        %435 = vmatpush1.msra.mxu0 0.0
        %436 = vmatprep.subr.mxu0 0.0
        %437 = vmatpush1.msra.mxu0 %v322
        %438 = vmatprep.subr.mxu0 0.0
        %439 = vmatpush1.msra.mxu0 %v321
        %440 = vmatprep.subr.mxu0 0.0
        %441 = vmatpush2.msra.mxu0 0.0
        %442 = vmatprep.subr.mxu0 0.0
        %443 = vmatpush2.msra.mxu0 0.0
        %444 = vmatprep.subr.mxu0 0.0
        %445 = vmatpush2.msra.mxu0 0.0
        %446 = vmatprep.subr.mxu0 0.0
        %447 = vmatpush2.msra.mxu0 0.0
        %448 = vmatprep.subr.mxu0 0.0
        %449 = vmatpush2.msra.mxu0 0.0
        %450 = vmatprep.subr.mxu0 0.0
        %451 = vmatpush2.msra.mxu0 0.0
        %452 = vmatprep.subr.mxu0 0.0
        %453 = vmatpush2.msra.mxu0 0.0
        %454 = vmatprep.subr.mxu0 0.0
        %455 = vmatpush2.msra.mxu0 0.0
        %456 = vmatprep.subr.mxu0 0.0
        %457 = vmatpush2.msra.mxu0 0.0
        %458 = vmatprep.subr.mxu0 0.0
        %459 = vmatpush2.msra.mxu0 0.0
        %460 = vmatprep.subr.mxu0 0.0
        %461 = vmatpush2.msra.mxu0 0.0
        %462 = vmatprep.subr.mxu0 0.0
        %463 = vmatpush2.msra.mxu0 0.0
        %464 = vmatprep.subr.mxu0 0.0
        %465 = vmatpush2.msra.mxu0 0.0
        %466 = vmatprep.subr.mxu0 0.0
        %467 = vmatpush2.msra.mxu0 0.0
        %468 = vmatprep.subr.mxu0 0.0
        %469 = vmatpush2.msra.mxu0 0.0
        %470 = vmatprep.subr.mxu0 0.0
        %471 = vmatpush2.msra.mxu0 0.0
        %472 = vmatprep.mubr.f32.mxu0 0.0
        %473 = vmatmul.mubr.f32.gmra.mxu0 %v406
        %v474 = vpop.f32.mrf.mxu0
        %v475 = vadd.f32 %v404, %v474
        %v476 = vpop.f32.mrf.mxu0
        %477 = vdwg.mxu0
        %vm478 = vcmask 261120
        %479 = vst.msk [vmem:[%s319] sm:$0xff] %vm478, %v475
        %s480 = sand.u32 %s165, 1
        %s481 = scalar_lea.sflag [#allocation4], %s480
        %s482 = sand.u32 %s165, 1
        %s483 = smul.addr %s482, 8
        %s484 = scalar_lea.vmem [#allocation10], %s483
        // Predicated region
        $region57: #{tpu_custom_call.1} parent=39 // pred_check
          %p485 = pneg %p175
        $region58: #{tpu_custom_call.1} parent=39 // pred_check_branch
          %487 = sbr.rel (%p485) target = $region60
        $region59: #{tpu_custom_call.1} parent=39 // pred_region
          %s489 = ssub.s32 128, 128
          %490 = vsyncadd %s481, %s489
          %s491 = sadd.s32 %s31, %s30
          %s492 = smul.addr %s491, 128
          %s493 = scalar_lea.hbm %s5, %s492
          %s495 = sshll.u32 %s484, 4
          %s496 = int_to_ptr.vmem [resolvable:$true] %s495
          %498 = dma.vmem_to_hbm [thread:$0]  %s496, 128, %s493, %s481
        $region60: #{tpu_custom_call.1} parent=39 // pred_fallthru
          _
      $region40: #{tpu_custom_call.1} parent=5 // pred_fallthru
        _
      %p499 = scmp.le.s32.totalorder 2, %s21
      // Predicated region
      $region61: #{tpu_custom_call.1} parent=5 // pred_check
        %p500 = pneg %p499
      $region62: #{tpu_custom_call.1} parent=5 // pred_check_branch
        %502 = sbr.rel (%p500) target = $region64
      $region63: #{tpu_custom_call.1} parent=5 // pred_region
        %s503 = ssub.s32 %s21, 2
        // Predicated region
        $region65: #{tpu_custom_call.1} parent=63 // pred_check
          %p504 = pneg %p181
        $region66: #{tpu_custom_call.1} parent=63 // pred_check_branch
          %506 = sbr.rel (%p504) target = $region68
        $region67: #{tpu_custom_call.1} parent=63 // pred_region
          %s507 = sand.u32 %s166, 1
          %s508 = scalar_lea.sflag [#allocation4], %s507
          %s509 = sand.u32 %s166, 1
          %s510 = smul.addr %s509, 8
          %s511 = scalar_lea.vmem [#allocation10], %s510
          %512 = dma.done %s508, 128
        $region68: #{tpu_custom_call.1} parent=63 // pred_fallthru
          _
      $region64: #{tpu_custom_call.1} parent=5 // pred_fallthru
        _
    $region6: #{tpu_custom_call.1} parent=1 // loop_footer
      %s25 = sadd.s32 1, %s21
    $region7: #{tpu_custom_call.1} parent=1 // loop_footer_branch
      %20 = sbr.rel target = $region3
    $region8: #{tpu_custom_call.1} parent=1 // loop_exit
      _
    %513 = vsyncpa [#allocation3], 1
    %s514 = scalar_lea.sflag [#allocation3], 1
    %515 = vsyncpa %s514, 1
    %516 = vsyncpa [#allocation6], 1
    %s517 = scalar_lea.sflag [#allocation6], 1
    %518 = vsyncpa %s517, 1
    %519 = vsyncpa [#allocation9], 1
    %520 = vsyncpa [#allocation4], 1
    %s521 = scalar_lea.sflag [#allocation4], 1
    %522 = vsyncpa %s521, 1

</llo_original>
